<compile_context>
chip_gen: v5e
topology: v5e:2x2
jax: 0.10.0
libtpu: 0.0.40
codegen_flags: <defaults>
</compile_context>

<pallas_src>
import functools

import jax
import jax.numpy as jnp
from jax import lax
from jax.experimental import pallas as pl
from jax.experimental.pallas import tpu as pltpu


def _num_tensorcores():
    """2 on v7x (two TensorCores per chip), 1 on v5e/v6e/unknown."""
    try:
        kind = str(jax.devices()[0].device_kind).lower()
    except Exception:
        return 1
    return 2 if "v7" in kind else 1


def _sublane_multiple(itemsize):
    return {4: 8, 2: 16, 1: 32}.get(itemsize, 8)


def _pick_tile_rows(g_rows, lane_width, itemsize):
    """Packed rows per tile, budgeted on the real (lane-padded) VMEM footprint."""
    budget = 3 * 1024 * 1024                        # ~3 MiB per (pred + target) buffer set
    lanes_padded = ((lane_width + 127) // 128) * 128
    per_row = lanes_padded * itemsize + 128 * 4     # pred row + lane-padded int32 target row
    sub = _sublane_multiple(itemsize)
    tg = max(sub, (budget // per_row // sub) * sub)
    return g_rows if tg >= g_rows else tg


def _picked_colsum_kernel(tprime_ref, pred_ref, out_ref, *, n_classes):
    """Accumulate per-lane sums of pred[i, t_i] over this core's packed-row tiles.

    tprime_ref : (tg, k) int32 packed-lane target index per (group, slot);
                 -1 for padding rows (never matches a lane index).
    pred_ref   : (tg, L=k*C) log-probs at native dtype, lane packed.
    out_ref    : (1, L) f32 per-core per-lane partial sums, resident across the
                 inner ("arbitrary") grid axis.
    """
    j = pl.program_id(1)

    @pl.when(j == 0)
    def _init():
        out_ref[...] = jnp.zeros_like(out_ref)

    pred = pred_ref[...]                                   # (tg, L), native dtype
    tprime = tprime_ref[...].astype(jnp.float32)           # (tg, k), small exact ints
    k = tprime.shape[1]
    tl = pred.shape[1]

    # expand[s, l] = 1.0 iff lane l belongs to slot s (l // C == s).  Built without
    # integer division; tiny (k, L) array rebuilt per step (negligible).
    lane_ids = lax.broadcasted_iota(jnp.int32, (k, tl), 1)
    slot_lo = lax.broadcasted_iota(jnp.int32, (k, tl), 0) * n_classes
    diff = lane_ids - slot_lo
    expand = jnp.where((diff >= 0) & (diff < n_classes), 1.0, 0.0)

    # t_exp[g, l] = tprime[g, l // C]; exactly one 0/1 term per output so this is
    # exact in any matmul precision, and essentially free on the otherwise idle MXU.
    t_exp = jnp.dot(tprime, expand, preferred_element_type=jnp.float32)   # (tg, L)

    lane_f = lax.broadcasted_iota(jnp.int32, (1, tl), 1).astype(jnp.float32)
    onehot = t_exp == lane_f                               # (tg, L); -1 rows never match

    # Compare/select at native dtype (dtype-matched zero); cast only for the f32
    # accumulation.  Garbage (even NaN) in ragged pred rows is never selected.
    sel = jnp.where(onehot, pred, jnp.zeros((), dtype=pred.dtype))
    out_ref[...] += jnp.sum(sel.astype(jnp.float32), axis=0, keepdims=True)


def unmasked_weighted_nll_loss(pred, target, weight=None, *, tile_rows=None,
                               num_cores=None):
    """pred: (N, C) log-probs (any float dtype), target: (N,) int -> scalar loss."""
    n_rows, n_classes = pred.shape
    target = target.astype(jnp.int32)
    if weight is not None:
        weight = weight.reshape(-1).astype(jnp.float32)

    k = max(1, 128 // n_classes)           # original rows packed per lane group
    lanes = k * n_classes                  # packed minor dim (128 when C divides 128)
    n_main = (n_rows // k) * k
    g_rows = n_main // k
    itemsize = pred.dtype.itemsize
    sub = _sublane_multiple(itemsize)

    num = jnp.float32(0.0)                 # sum_i pred[i, t_i]
    wnum = jnp.float32(0.0)                # sum_i w[t_i] * pred[i, t_i]

    if g_rows > 0:
        # Metadata-only reshape when n_main == n_rows (the common case); the slice
        # for a ragged N may copy, but only the small <k-row tail is excluded.
        pred_main = (pred if n_main == n_rows else pred[:n_main]).reshape(g_rows, lanes)
        slot_off = (jnp.arange(n_main, dtype=jnp.int32) % k) * n_classes
        tprime = (target[:n_main] + slot_off).reshape(g_rows, k)

        if tile_rows is None:
            tg = _pick_tile_rows(g_rows, lanes, itemsize)
        else:
            tg = min(int(tile_rows), g_rows)
            if tg < g_rows:
                tg = max(sub, (tg // sub) * sub)

        tiles = -(-g_rows // tg)
        nc = _num_tensorcores() if num_cores is None else int(num_cores)
        nc = max(1, min(nc, tiles))
        spc = -(-tiles // nc)              # row tiles per core
        pad_rows = nc * spc * tg - g_rows
        if pad_rows > 0:
            # Sentinel -1 never equals a lane index, so padded / duplicated /
            # ragged rows contribute exactly zero -- no in-kernel masks needed.
            tprime = jnp.pad(tprime, ((0, pad_rows), (0, 0)), constant_values=-1)
        last_block = tiles - 1

        colsum = pl.pallas_call(
            functools.partial(_picked_colsum_kernel, n_classes=n_classes),
            out_shape=jax.ShapeDtypeStruct((nc, lanes), jnp.float32),
            grid=(nc, spc),
            in_specs=[
                pl.BlockSpec((tg, k), lambda c, j: (c * spc + j, 0)),
                # Clamp so the extra step of an uneven core split re-reads the last
                # in-bounds tile; its -1 targets zero its contribution.
                pl.BlockSpec((tg, lanes),
                             lambda c, j: (jnp.minimum(c * spc + j, last_block), 0)),
            ],
            out_specs=pl.BlockSpec((1, lanes), lambda c, j: (c, 0)),
            compiler_params=pltpu.CompilerParams(
                # TODO(synk): on v7x verify "parallel" really shards the leading axis
                # across both TensorCores; switch to pltpu.CORE_PARALLEL if codegen
                # shows no cross-core split.
                dimension_semantics=("parallel", "arbitrary"),
                vmem_limit_bytes=32 * 1024 * 1024,
            ),
            cost_estimate=pl.CostEstimate(
                flops=2 * n_main * n_classes,
                transcendentals=0,
                bytes_accessed=n_main * n_classes * itemsize + n_main * 4 + nc * lanes * 4,
            ),
        )(tprime, pred_main)

        per_lane = jnp.sum(colsum, axis=0)                 # (lanes,); lane l <-> class l % C
        num = jnp.sum(per_lane)
        if weight is not None:
            wnum = jnp.sum(per_lane * jnp.tile(weight, k))

    if n_main < n_rows:                                    # < k leftover rows: plain JAX
        tail_pred = pred[n_main:].astype(jnp.float32)
        tail_t = target[n_main:]
        tail_picked = tail_pred[jnp.arange(n_rows - n_main), tail_t]
        num = num + jnp.sum(tail_picked)
        if weight is not None:
            wnum = wnum + jnp.sum(weight[tail_t] * tail_picked)

    if weight is None:
        return -num
    den = jnp.sum(weight[target])                          # target-only, tiny; plain JAX
    return -wnum / den


def _reference(pred, target, weight=None):
    """Pure-JAX reference matching the PyTorch module exactly."""
    picked = pred[jnp.arange(pred.shape[0]), target]
    if weight is None:
        return -jnp.sum(picked)
    w_t = weight[target]
    return -jnp.sum(w_t * picked) / jnp.sum(w_t)


if __name__ == "__main__":
    batch, seq_len, n_classes = 2, 8, 8
    N = batch * seq_len

    key = jax.random.PRNGKey(0)
    k1, k2 = jax.random.split(key)
    logits = jax.random.normal(k1, (N, n_classes), dtype=jnp.float32)
    pred = jax.nn.log_softmax(logits, axis=-1)             # NLLLoss expects log-probs
    target = jax.random.randint(k2, (N,), 0, n_classes, dtype=jnp.int32)
    weight = jnp.linspace(0.5, 1.5, n_classes, dtype=jnp.float32)

    # weight=None path (module default)
    loss = unmasked_weighted_nll_loss(pred, target, weight=None)
    jax.block_until_ready(loss)
    ref = _reference(pred, target, None)
    assert jnp.allclose(loss, ref, rtol=1e-5, atol=1e-5), (loss, ref)

    # weighted path
    loss_w = unmasked_weighted_nll_loss(pred, target, weight=weight)
    jax.block_until_ready(loss_w)
    ref_w = _reference(pred, target, weight)
    assert jnp.allclose(loss_w, ref_w, rtol=1e-5, atol=1e-5), (loss_w, ref_w)

    # native bf16 streaming path (compare/select in bf16, f32 accumulation)
    pred_bf16 = pred.astype(jnp.bfloat16)
    loss_bf = unmasked_weighted_nll_loss(pred_bf16, target, weight=weight)
    jax.block_until_ready(loss_bf)
    ref_bf = _reference(pred_bf16.astype(jnp.float32), target, weight)
    assert jnp.allclose(loss_bf, ref_bf, rtol=1e-4, atol=1e-4), (loss_bf, ref_bf)

    # ragged-tail path: N=36 is not a multiple of k = 128 // C = 16
    N2 = 36
    k3, k4 = jax.random.split(jax.random.PRNGKey(1))
    pred2 = jax.nn.log_softmax(
        jax.random.normal(k3, (N2, n_classes), dtype=jnp.float32), axis=-1)
    target2 = jax.random.randint(k4, (N2,), 0, n_classes, dtype=jnp.int32)
    loss2 = unmasked_weighted_nll_loss(pred2, target2, weight=weight)
    jax.block_until_ready(loss2)
    ref2 = _reference(pred2, target2, weight)
    assert jnp.allclose(loss2, ref2, rtol=1e-5, atol=1e-5), (loss2, ref2)
    loss2u = unmasked_weighted_nll_loss(pred2, target2, weight=None)
    jax.block_until_ready(loss2u)
    ref2u = _reference(pred2, target2, None)
    assert jnp.allclose(loss2u, ref2u, rtol=1e-5, atol=1e-5), (loss2u, ref2u)

    # multi-tile + forced 2-way core split with an uneven split (clamped duplicate
    # tile + -1 padding): N=640 -> 40 packed rows, tile_rows=8 -> 5 tiles over 2 cores.
    N3 = 640
    k5, k6 = jax.random.split(jax.random.PRNGKey(2))
    pred3 = jax.nn.log_softmax(
        jax.random.normal(k5, (N3, n_classes), dtype=jnp.float32), axis=-1)
    target3 = jax.random.randint(k6, (N3,), 0, n_classes, dtype=jnp.int32)
    loss3 = unmasked_weighted_nll_loss(pred3, target3, weight=weight,
                                       tile_rows=8, num_cores=2)
    jax.block_until_ready(loss3)
    ref3 = _reference(pred3, target3, weight)
    assert jnp.allclose(loss3, ref3, rtol=1e-5, atol=1e-5), (loss3, ref3)
    loss3u = unmasked_weighted_nll_loss(pred3, target3, weight=None,
                                        tile_rows=8, num_cores=2)
    jax.block_until_ready(loss3u)
    ref3u = _reference(pred3, target3, None)
    assert jnp.allclose(loss3u, ref3u, rtol=1e-5, atol=1e-5), (loss3u, ref3u)

    print("KERNEL_OK")
</pallas_src>

<mosaic_0001>
module attributes {stable_mosaic.version = 11 : i64} {
  func.func @_picked_colsum_kernel(%arg0: i32, %arg1: i32, %arg2: memref<1x16xi32, #tpu.memory_space<vmem>>, %arg3: memref<1x128xf32, #tpu.memory_space<vmem>>, %arg4: memref<1x128xf32, #tpu.memory_space<vmem>>) attributes {dimension_semantics = [#tpu.dimension_semantics<parallel>, #tpu.dimension_semantics<arbitrary>], iteration_bounds = array<i64: 1, 1>, scalar_prefetch = 0 : i64, scratch_operands = 0 : i64, tpu.core_type = #tpu.core_type<tc>, window_params = [{transform_indices = @transform_0, window_bounds = array<i64: 1, 16>}, {transform_indices = @transform_1, window_bounds = array<i64: 1, 128>}, {transform_indices = @transform_2, window_bounds = array<i64: 1, 128>}]} {
    %c0_i32 = arith.constant 0 : i32
    %0 = arith.cmpi eq, %arg1, %c0_i32 : i32
    %1 = arith.extui %0 : i1 to i32
    %c0_i32_0 = arith.constant 0 : i32
    %2 = arith.cmpi ne, %1, %c0_i32_0 : i32
    scf.if %2 {
      %cst_14 = arith.constant 0.000000e+00 : f32
      %30 = vector.broadcast %cst_14 : f32 to vector<1x128xf32>
      %c0_15 = arith.constant 0 : index
      %c0_16 = arith.constant 0 : index
      %31 = vector.load %arg4[%c0_15, %c0_16] : memref<1x128xf32, #tpu.memory_space<vmem>>, vector<1x128xf32>
      tpu.vector_store %arg4[%c0_15, %c0_16], %30 {strides = array<i32>} : memref<1x128xf32, #tpu.memory_space<vmem>>, vector<1x128xf32>,
    } else {
    }
    %c0 = arith.constant 0 : index
    %c0_1 = arith.constant 0 : index
    %3 = vector.load %arg3[%c0, %c0_1] : memref<1x128xf32, #tpu.memory_space<vmem>>, vector<1x128xf32>
    %c0_2 = arith.constant 0 : index
    %c0_3 = arith.constant 0 : index
    %4 = vector.load %arg2[%c0_2, %c0_3] : memref<1x16xi32, #tpu.memory_space<vmem>>, vector<1x16xi32>
    %5 = arith.sitofp %4 : vector<1x16xi32> to vector<1x16xf32>
    %6 = tpu.iota {dimensions = array<i32: 1>} : vector<16x128xi32>
    %7 = tpu.iota {dimensions = array<i32: 0>} : vector<16x128xi32>
    %c8_i32 = arith.constant 8 : i32
    %8 = vector.broadcast %c8_i32 : i32 to vector<16x128xi32>
    %9 = arith.muli %7, %8 : vector<16x128xi32>
    %10 = arith.subi %6, %9 : vector<16x128xi32>
    %c0_i32_4 = arith.constant 0 : i32
    %11 = vector.broadcast %c0_i32_4 : i32 to vector<16x128xi32>
    %12 = arith.cmpi sge, %10, %11 : vector<16x128xi32>
    %c8_i32_5 = arith.constant 8 : i32
    %13 = vector.broadcast %c8_i32_5 : i32 to vector<16x128xi32>
    %14 = arith.cmpi slt, %10, %13 : vector<16x128xi32>
    %15 = arith.andi %12, %14 : vector<16x128xi1>
    %cst = arith.constant 1.000000e+00 : f32
    %cst_6 = arith.constant 0.000000e+00 : f32
    %16 = vector.broadcast %cst : f32 to vector<16x128xf32>
    %17 = vector.broadcast %cst_6 : f32 to vector<16x128xf32>
    %18 = arith.select %15, %16, %17 : vector<16x128xi1>, vector<16x128xf32>
    %cst_7 = arith.constant dense<0.000000e+00> : vector<1x128xf32>
    %19 = tpu.matmul %5, %18, %cst_7 {dimension_numbers = #tpu.dot_dimension_numbers<[1], [0], [0], [1], [0, 0, 1, 1], [], []>} : vector<1x16xf32>, vector<16x128xf32>, vector<1x128xf32> -> vector<1x128xf32>
    %20 = tpu.iota {dimensions = array<i32: 1>} : vector<1x128xi32>
    %21 = arith.sitofp %20 : vector<1x128xi32> to vector<1x128xf32>
    %22 = arith.cmpf oeq, %19, %21 : vector<1x128xf32>
    %cst_8 = arith.constant 0.000000e+00 : f32
    %23 = vector.broadcast %cst_8 : f32 to vector<1x128xf32>
    %24 = arith.select %22, %3, %23 : vector<1x128xi1>, vector<1x128xf32>
    %c0_9 = arith.constant 0 : index
    %c0_10 = arith.constant 0 : index
    %25 = vector.load %arg4[%c0_9, %c0_10] : memref<1x128xf32, #tpu.memory_space<vmem>>, vector<1x128xf32>
    %cst_11 = arith.constant dense<0.000000e+00> : vector<128xf32>
    %26 = vector.multi_reduction <add>, %24, %cst_11 [0] : vector<1x128xf32> to vector<128xf32>
    %27 = vector.shape_cast %26 : vector<128xf32> to vector<1x128xf32>
    %28 = arith.addf %25, %27 : vector<1x128xf32>
    %c0_12 = arith.constant 0 : index
    %c0_13 = arith.constant 0 : index
    %29 = vector.load %arg4[%c0_12, %c0_13] : memref<1x128xf32, #tpu.memory_space<vmem>>, vector<1x128xf32>
    tpu.vector_store %arg4[%c0_12, %c0_13], %28 {strides = array<i32>} : memref<1x128xf32, #tpu.memory_space<vmem>>, vector<1x128xf32>,
    return
  }
  func.func @transform_0(%arg0: i32, %arg1: i32) -> (i32, i32) {
    %c1_i32 = arith.constant 1 : i32
    %0 = arith.muli %arg0, %c1_i32 : i32
    %1 = arith.addi %0, %arg1 : i32
    %c0_i32 = arith.constant 0 : i32
    %c0_i32_0 = arith.constant 0 : i32
    return %1, %c0_i32 : i32, i32
  }
  func.func @transform_1(%arg0: i32, %arg1: i32) -> (i32, i32) {
    %c1_i32 = arith.constant 1 : i32
    %0 = arith.muli %arg0, %c1_i32 : i32
    %1 = arith.addi %0, %arg1 : i32
    %c0_i32 = arith.constant 0 : i32
    %2 = arith.minsi %1, %c0_i32 : i32
    %c0_i32_0 = arith.constant 0 : i32
    %c0_i32_1 = arith.constant 0 : i32
    return %2, %c0_i32_0 : i32, i32
  }
  func.func @transform_2(%arg0: i32, %arg1: i32) -> (i32, i32) {
    %c0_i32 = arith.constant 0 : i32
    %c0_i32_0 = arith.constant 0 : i32
    return %arg0, %c0_i32 : i32, i32
  }
}

</mosaic_0001>

<llo_original>
// kernel: tpu_custom_call.1
$region0: #{tpu_custom_call.1}
  #allocation0 [shape = 'u32[]', space=smem, size = 0x4, offset = 0x4, fixed_abs, tag = 'smem constant byte address 0x4 - core index']
  #allocation1 [shape = 'u32[72,128]{1,0:T(1,128)}', space=vmem, size = 0x9000, scoped, tag = 'internal scratch']
  %s0 = inlined_call_operand.hbm [shape: s32[1,16], index: 0, kind: input, shape index: {}]
  %s1 = inlined_call_operand.hbm [shape: f32[1,128], index: 1, kind: input, shape index: {}]
  %s2 = inlined_call_operand.hbm [shape: f32[1,128], index: 2, kind: output, shape index: {}]
  %s3 = sld [smem:[#allocation0]]
  $region30: #{tpu_custom_call.1} parent=0
    _
  %s5 = ssub.s32 1, %s3
  %s6 = scalar_select 0, %s5, %s3
  $region1: #{tpu_custom_call.1} parent=0
    #allocation2 [shape = 'u8[512]{0}', space=vmem, size = 0x400, scoped, tag = 'input window, operand 0, single buffered']
    #allocation3 [shape = 's32[1]{0}', space=sflag, size = 0x4, scoped, tag = 'scoped memory for tpu_custom_call.1']
    #allocation4 [shape = 's32[1]{0}', space=sflag, size = 0x4, scoped, tag = 'scoped memory for tpu_custom_call.1']
    #allocation5 [shape = 'u8[512]{0}', space=vmem, size = 0x400, scoped, tag = 'input window, operand 1, single buffered']
    #allocation6 [shape = 's32[1]{0}', space=sflag, size = 0x4, scoped, tag = 'scoped memory for tpu_custom_call.1']
    #allocation7 [shape = 'u8[512]{0}', space=vmem, size = 0x400, scoped, tag = 'output window, operand 0, single buffered']
    %7 = vsyncpa [#allocation3], 0
    %8 = vsyncpa [#allocation6], 0
    %9 = vsyncpa [#allocation4], 0
    // Predicated region
    $region2: #{tpu_custom_call.1} parent=1 // pred_check
      _
    $region3: #{tpu_custom_call.1} parent=1 // pred_check_branch
      %11 = sbr.rel (0) target = $region5
    $region4: #{tpu_custom_call.1} parent=1 // pred_region
      %s12 = sadd.s32 0, 0
      %14 = vsyncadd [#allocation3], 0
      %s15 = scalar_lea.hbm %s0, %s12
      %s17 = sshll.u32 %s15, 4
      %s18 = int_to_ptr.hbm [resolvable:$true] %s17
      %s19 = sshll.u32 [#allocation2], 4
      %s20 = int_to_ptr.vmem [resolvable:$true] %s19
      %22 = dma.hbm_to_vmem [thread:$0]  %s18, 16, %s20, [#allocation3]
    $region5: #{tpu_custom_call.1} parent=1 // pred_fallthru
      _
    // Predicated region
    $region6: #{tpu_custom_call.1} parent=1 // pred_check
      _
    $region7: #{tpu_custom_call.1} parent=1 // pred_check_branch
      %24 = sbr.rel (0) target = $region9
    $region8: #{tpu_custom_call.1} parent=1 // pred_region
      %s25 = sadd.s32 0, 0
      %p26 = scmp.lt.s32.totalorder %s25, 0
      %s27 = scalar_select %p26, %s25, 0
      %29 = vsyncadd [#allocation6], 0
      %s30 = scalar_lea.hbm %s1, %s27
      %s32 = sshll.u32 %s30, 4
      %s33 = int_to_ptr.hbm [resolvable:$true] %s32
      %s34 = sshll.u32 [#allocation5], 4
      %s35 = int_to_ptr.vmem [resolvable:$true] %s34
      %37 = dma.hbm_to_vmem [thread:$0]  %s33, 16, %s35, [#allocation6]
    $region9: #{tpu_custom_call.1} parent=1 // pred_fallthru
      _
    // Predicated region
    $region10: #{tpu_custom_call.1} parent=1 // pred_check
      _
    $region11: #{tpu_custom_call.1} parent=1 // pred_check_branch
      %39 = sbr.rel (0) target = $region13
    $region12: #{tpu_custom_call.1} parent=1 // pred_region
      %41 = dma.done [#allocation3], 16
    $region13: #{tpu_custom_call.1} parent=1 // pred_fallthru
      _
    // Predicated region
    $region14: #{tpu_custom_call.1} parent=1 // pred_check
      _
    $region15: #{tpu_custom_call.1} parent=1 // pred_check_branch
      %43 = sbr.rel (0) target = $region17
    $region16: #{tpu_custom_call.1} parent=1 // pred_region
      %45 = dma.done [#allocation6], 16
    $region17: #{tpu_custom_call.1} parent=1 // pred_fallthru
      _
    %s46 = sadd.s32 0, 0
    %s47 = sadd.s32 0, 0
    %p48 = scmp.lt.s32.totalorder %s47, 0
    %s49 = scalar_select %p48, %s47, 0
    %p50 = scmp.eq.s32.totalorder 0, 0
    // Predicated region
    $region18: #{tpu_custom_call.1} parent=1 // pred_check
      %p51 = pneg %p50
    $region19: #{tpu_custom_call.1} parent=1 // pred_check_branch
      %53 = sbr.rel (%p51) target = $region21
    $region20: #{tpu_custom_call.1} parent=1 // pred_region
      %54 = vst [vmem:[#allocation7] sm:$0x1] 0.0
    $region21: #{tpu_custom_call.1} parent=1 // pred_fallthru
      _
    %v55 = vld [vmem:[#allocation5] sm:$0x1]
    %v56 = vld [vmem:[#allocation2] sm:$0x1]
    %v57 = vcvt.s32.f32 %v56
    %v58 = vlaneseq
    %v59 = vand.u32 %v58, 127
    %v60 = vlaneseq
    %v61 = vshrl.u32 %v60, 7
    %v62 = vadd.s32 %v61, 8
    %v63 = vmul.u32 %v61, 8
    %v64 = vmul.u32 %v62, 8
    %v65 = vsub.s32 %v59, %v63
    %v66 = vsub.s32 %v59, %v64
    %vm67 = vcmp.ge.s32.totalorder %v65, 0
    %vm68 = vcmp.ge.s32.totalorder %v66, 0
    %vm69 = vcmp.lt.s32.totalorder %v65, 8
    %vm70 = vcmp.lt.s32.totalorder %v66, 8
    %vm71 = vmand %vm67, %vm69
    %vm72 = vmand %vm68, %vm70
    %v73 = vsel %vm71, 1.0, 0.0
    %v74 = vsel %vm72, 1.0, 0.0
    %vm75 = vcmask 130048
    %v77 = vsel %vm75, %v57, 0
    %79 = vmatpush.msra.mxu0 0.0
    %80 = vmatpush.msra.mxu0 0.0
    %81 = vmatpush.msra.mxu0 0.0
    %82 = vmatpush.msra.mxu0 0.0
    %83 = vmatpush.msra.mxu0 0.0
    %84 = vmatpush.msra.mxu0 0.0
    %85 = vmatpush.msra.mxu0 0.0
    %86 = vmatpush.msra.mxu0 0.0
    %87 = vmatpush.msra.mxu0 0.0
    %88 = vmatpush.msra.mxu0 0.0
    %89 = vmatpush.msra.mxu0 0.0
    %90 = vmatpush.msra.mxu0 0.0
    %91 = vmatpush.msra.mxu0 0.0
    %92 = vmatpush.msra.mxu0 0.0
    %93 = vmatpush.msra.mxu0 %v74
    %94 = vmatpush.msra.mxu0 %v73
    %95 = vmatmul.f32.gmra.mxu0 %v77
    %v96 = vpop.f32.mrf.mxu0
    %v97 = vadd.f32 0.0, %v96
    %98 = vdwg.mxu0
    %v99 = vcvt.s32.f32 %v59
    %vm100 = vcmp.eq.f32.partialorder %v97, %v99
    %v101 = vsel %vm100, %v55, 0.0
    %v102 = vld [vmem:[#allocation7] sm:$0x1]
    %v103 = vadd.f32 %v101, 0.0
    %v104 = vadd.f32 %v102, %v103
    %105 = vst [vmem:[#allocation7] sm:$0x1] %v104
    // Predicated region
    $region22: #{tpu_custom_call.1} parent=1 // pred_check
      _
    $region23: #{tpu_custom_call.1} parent=1 // pred_check_branch
      %107 = sbr.rel (0) target = $region25
    $region24: #{tpu_custom_call.1} parent=1 // pred_region
      %109 = vsyncadd [#allocation4], 0
      %s111 = sshll.u32 [#allocation7], 4
      %s112 = int_to_ptr.vmem [resolvable:$true] %s111
      %s113 = sshll.u32 %s2, 4
      %s114 = int_to_ptr.hbm [resolvable:$true] %s113
      %116 = dma.vmem_to_hbm [thread:$0]  %s112, 16, %s114, [#allocation4]
    $region25: #{tpu_custom_call.1} parent=1 // pred_fallthru
      _
    // Predicated region
    $region26: #{tpu_custom_call.1} parent=1 // pred_check
      _
    $region27: #{tpu_custom_call.1} parent=1 // pred_check_branch
      %118 = sbr.rel (0) target = $region29
    $region28: #{tpu_custom_call.1} parent=1 // pred_region
      %120 = dma.done [#allocation4], 16
    $region29: #{tpu_custom_call.1} parent=1 // pred_fallthru
      _
    %121 = vsyncpa [#allocation3], 1
    %122 = vsyncpa [#allocation6], 1
    %123 = vsyncpa [#allocation4], 1

</llo_original>
